<compile_context>
chip_gen: v5e
topology: v5e:2x2
jax: 0.10.0
libtpu: 0.0.40
codegen_flags: <defaults>
</compile_context>

<pallas_src>
import functools

import jax
import jax.numpy as jnp
from jax import lax
from jax.experimental import pallas as pl
from jax.experimental.pallas import tpu as pltpu


# ----------------------------------------------------------------------------
# Pallas kernel: depthwise k x k conv (stride 1) + per-channel affine + act
# ----------------------------------------------------------------------------
def _dw_kernel(w_sm, s_sm, b_sm, x_ref, o_ref, xp_ref,
               *, k, pad, cb, ho, wo, act, slope):
    """One (batch, channel-block) step.

    w_sm : (C*k*k,) f32 SMEM  - depthwise filter taps, [c, di, dj] flattened
    s_sm : (C,)     f32 SMEM  - folded BN scale (or 1.0)
    b_sm : (C,)     f32 SMEM  - folded BN bias (or conv bias)
    x_ref: (1, cb, H, W)   VMEM input block   (W on lanes, H on sublanes)
    o_ref: (1, cb, ho, wo) VMEM output block
    xp_ref: (H + 2*pad, W + 2*pad) f32 VMEM scratch (zero halo built in VMEM)
    """
    H = x_ref.shape[2]
    W = x_ref.shape[3]
    c_blk = pl.program_id(1)

    # Zero the scratch once per grid step; only the halo needs to stay zero
    # (the interior is overwritten per channel below).
    xp_ref[...] = jnp.zeros_like(xp_ref)

    for cc in range(cb):  # unrolled: cb is a small static constant
        ch = c_blk * cb + cc
        wbase = ch * (k * k)

        # Stage this channel's plane into the padded VMEM scratch (halo = 0).
        xp_ref[pad:pad + H, pad:pad + W] = x_ref[0, cc]

        acc = jnp.zeros((ho, wo), jnp.float32)
        for di in range(k):
            # One sublane-shifted row slab per di, reused across the k lane taps.
            slab = xp_ref[di:di + ho, :]                 # (ho, W + 2*pad)
            for dj in range(k):
                tap = slab[:, dj:dj + wo]                # (ho, wo)
                acc = acc + tap * w_sm[wbase + di * k + dj]

        # Fused per-channel affine (eval-mode BN or bias) + activation, f32 VPU.
        y = acc * s_sm[ch] + b_sm[ch]
        if act == "relu":
            y = jnp.maximum(y, 0.0)
        elif act == "leaky_relu":
            y = jnp.where(y >= 0.0, y, y * slope)
        elif act == "silu":
            y = y * (1.0 / (1.0 + jnp.exp(-y)))
        else:
            # TODO(synk): elu / celu / mish / gelu epilogues not wired up yet.
            y = jnp.maximum(y, 0.0)
        o_ref[0, cc] = y


def dwconv_forward(x, weight, scale, bias, *, kernel_size, stride=1, padding=0,
                   act="relu", negative_slope=0.01, channels_per_block=1):
    """Depthwise conv + per-channel affine + activation.

    x      : (N, C, H, W) f32 (NCHW, PyTorch layout)
    weight : (C, 1, k, k) f32 (PyTorch grouped-conv OIHW layout)
    scale  : (C,) f32   (folded BN scale, or ones)
    bias   : (C,) f32   (folded BN bias, or conv bias)
    """
    N, C, H, W = x.shape
    k, p = kernel_size, padding
    ho1 = H + 2 * p - k + 1      # stride-1 output extent
    wo1 = W + 2 * p - k + 1
    cb = channels_per_block
    assert C % cb == 0, "channels_per_block must divide channels"

    w_flat = weight.reshape(C * k * k).astype(jnp.float32)
    scale = scale.astype(jnp.float32)
    bias = bias.astype(jnp.float32)

    kernel = functools.partial(_dw_kernel, k=k, pad=p, cb=cb, ho=ho1, wo=wo1,
                               act=act, slope=negative_slope)

    out = pl.pallas_call(
        kernel,
        out_shape=jax.ShapeDtypeStruct((N, C, ho1, wo1), jnp.float32),
        grid=(N, C // cb),
        in_specs=[
            pl.BlockSpec(memory_space=pltpu.MemorySpace.SMEM),   # filter taps
            pl.BlockSpec(memory_space=pltpu.MemorySpace.SMEM),   # scale
            pl.BlockSpec(memory_space=pltpu.MemorySpace.SMEM),   # bias
            pl.BlockSpec((1, cb, H, W), lambda n, c: (n, c, 0, 0)),
        ],
        out_specs=pl.BlockSpec((1, cb, ho1, wo1), lambda n, c: (n, c, 0, 0)),
        scratch_shapes=[pltpu.VMEM((H + 2 * p, W + 2 * p), jnp.float32)],
        compiler_params=pltpu.CompilerParams(
            dimension_semantics=("parallel", "parallel")),
    )(w_flat, scale, bias, x.astype(jnp.float32))

    if stride > 1:
        # Subsampling the stride-1 output is mathematically identical to a
        # strided depthwise conv.
        # TODO(synk): fold stride into the tap slicing (strided pl.ds on the
        # scratch) to avoid computing the discarded rows/cols.
        out = out[:, :, ::stride, ::stride]
    return out


# ----------------------------------------------------------------------------
# Module-level wrapper: DWCONV = Conv2d(groups=C) + [BN] + activation
# ----------------------------------------------------------------------------
def dwconv_module(x, params, *, kernel_size, stride=1, padding=0, act="relu",
                  negative_slope=0.01, batch_norm=False, channels_per_block=1,
                  eps=1e-5):
    C = x.shape[1]
    if batch_norm:
        scale = params["gamma"] / jnp.sqrt(params["var"] + eps)
        bias = params["beta"] - params["mean"] * scale
    else:
        scale = jnp.ones((C,), jnp.float32)
        bias = params["bias"]
    return dwconv_forward(x, params["weight"], scale, bias,
                          kernel_size=kernel_size, stride=stride,
                          padding=padding, act=act,
                          negative_slope=negative_slope,
                          channels_per_block=channels_per_block)


# ----------------------------------------------------------------------------
# Pure-JAX reference (lax.conv) for correctness checking
# ----------------------------------------------------------------------------
def dwconv_reference(x, params, *, kernel_size, stride=1, padding=0, act="relu",
                     negative_slope=0.01, batch_norm=False, eps=1e-5):
    C = x.shape[1]
    y = lax.conv_general_dilated(
        x, params["weight"], (stride, stride), [(padding, padding)] * 2,
        dimension_numbers=("NCHW", "OIHW", "NCHW"), feature_group_count=C,
        precision=lax.Precision.HIGHEST)
    if batch_norm:
        scale = params["gamma"] / jnp.sqrt(params["var"] + eps)
        bias = params["beta"] - params["mean"] * scale
    else:
        scale = jnp.ones((C,), jnp.float32)
        bias = params["bias"]
    y = y * scale[None, :, None, None] + bias[None, :, None, None]
    if act == "relu":
        return jnp.maximum(y, 0.0)
    if act == "leaky_relu":
        return jnp.where(y >= 0.0, y, y * negative_slope)
    if act == "silu":
        return y * jax.nn.sigmoid(y)
    return jnp.maximum(y, 0.0)


if __name__ == "__main__":
    key = jax.random.PRNGKey(0)
    ks = jax.random.split(key, 8)

    N, C, H, W = 2, 4, 16, 16
    x = jax.random.normal(ks[0], (N, C, H, W), jnp.float32)

    # --- Test 1: DWCONV(4, k=3, s=1, p=1, act='relu', batch_norm=True) ---
    p1 = {
        "weight": jax.random.normal(ks[1], (C, 1, 3, 3), jnp.float32) * 0.3,
        "gamma": jax.random.normal(ks[2], (C,), jnp.float32) * 0.1 + 1.0,
        "beta": jax.random.normal(ks[3], (C,), jnp.float32) * 0.1,
        "mean": jax.random.normal(ks[4], (C,), jnp.float32) * 0.1,
        "var": jax.random.uniform(ks[5], (C,), jnp.float32, 0.5, 1.5),
    }
    fwd1 = jax.jit(functools.partial(
        dwconv_module, kernel_size=3, stride=1, padding=1, act="relu",
        batch_norm=True, channels_per_block=2))
    out1 = jax.block_until_ready(fwd1(x, p1))
    ref1 = dwconv_reference(x, p1, kernel_size=3, stride=1, padding=1,
                            act="relu", batch_norm=True)
    assert out1.shape == (N, C, H, W), out1.shape
    assert jnp.allclose(out1, ref1, atol=1e-4, rtol=1e-4), \
        float(jnp.max(jnp.abs(out1 - ref1)))

    # --- Test 2: DWCONV(4, k=3, s=1, p=0, act='silu', batch_norm=False) ---
    p2 = {
        "weight": jax.random.normal(ks[6], (C, 1, 3, 3), jnp.float32) * 0.3,
        "bias": jax.random.normal(ks[7], (C,), jnp.float32) * 0.1,
    }
    fwd2 = jax.jit(functools.partial(
        dwconv_module, kernel_size=3, stride=1, padding=0, act="silu",
        batch_norm=False, channels_per_block=1))
    out2 = jax.block_until_ready(fwd2(x, p2))
    ref2 = dwconv_reference(x, p2, kernel_size=3, stride=1, padding=0,
                            act="silu", batch_norm=False)
    assert out2.shape == (N, C, H - 2, W - 2), out2.shape
    assert jnp.allclose(out2, ref2, atol=1e-4, rtol=1e-4), \
        float(jnp.max(jnp.abs(out2 - ref2)))

    # --- Test 3: DWCONV(4, k=3, s=2, p=1, act='relu', batch_norm=False) ---
    fwd3 = jax.jit(functools.partial(
        dwconv_module, kernel_size=3, stride=2, padding=1, act="relu",
        batch_norm=False, channels_per_block=4))
    out3 = jax.block_until_ready(fwd3(x, p2))
    ref3 = dwconv_reference(x, p2, kernel_size=3, stride=2, padding=1,
                            act="relu", batch_norm=False)
    assert out3.shape == (N, C, 8, 8), out3.shape
    assert jnp.allclose(out3, ref3, atol=1e-4, rtol=1e-4), \
        float(jnp.max(jnp.abs(out3 - ref3)))

    print("KERNEL_OK")
</pallas_src>

<mosaic_0001>
module attributes {stable_mosaic.version = 11 : i64} {
  func.func @_dw_kernel(%arg0: i32, %arg1: i32, %arg2: memref<36xf32, #tpu.memory_space<smem>>, %arg3: memref<4xf32, #tpu.memory_space<smem>>, %arg4: memref<4xf32, #tpu.memory_space<smem>>, %arg5: memref<1x2x16x16xf32, #tpu.memory_space<vmem>>, %arg6: memref<1x2x16x16xf32, #tpu.memory_space<vmem>>, %arg7: memref<18x18xf32, #tpu.memory_space<vmem>>) attributes {dimension_semantics = [#tpu.dimension_semantics<parallel>, #tpu.dimension_semantics<parallel>], iteration_bounds = array<i64: 2, 2>, scalar_prefetch = 0 : i64, scratch_operands = 1 : i64, tpu.core_type = #tpu.core_type<tc>, window_params = [{transform_indices = @transform_0, window_bounds = array<i64: 36>}, {transform_indices = @transform_1, window_bounds = array<i64: 4>}, {transform_indices = @transform_2, window_bounds = array<i64: 4>}, {transform_indices = @transform_3, window_bounds = array<i64: 1, 2, 16, 16>}, {transform_indices = @transform_4, window_bounds = array<i64: 1, 2, 16, 16>}]} {
    %cst = arith.constant 0.000000e+00 : f32
    %0 = vector.broadcast %cst : f32 to vector<18x18xf32>
    %c0 = arith.constant 0 : index
    %c0_0 = arith.constant 0 : index
    %1 = vector.load %arg7[%c0, %c0_0] : memref<18x18xf32, #tpu.memory_space<vmem>>, vector<18x18xf32>
    tpu.vector_store %arg7[%c0, %c0_0], %0 {strides = array<i32>} : memref<18x18xf32, #tpu.memory_space<vmem>>, vector<18x18xf32>,
    %c2_i32 = arith.constant 2 : i32
    %2 = arith.muli %arg1, %c2_i32 : i32
    %c0_i32 = arith.constant 0 : i32
    %3 = arith.addi %2, %c0_i32 : i32
    %c9_i32 = arith.constant 9 : i32
    %4 = arith.muli %3, %c9_i32 : i32
    %c0_1 = arith.constant 0 : index
    %c0_2 = arith.constant 0 : index
    %c0_3 = arith.constant 0 : index
    %c0_4 = arith.constant 0 : index
    %5 = vector.load %arg5[%c0_1, %c0_2, %c0_3, %c0_4] : memref<1x2x16x16xf32, #tpu.memory_space<vmem>>, vector<1x1x16x16xf32>
    %6 = vector.shape_cast %5 : vector<1x1x16x16xf32> to vector<16x16xf32>
    %c1 = arith.constant 1 : index
    %c1_5 = arith.constant 1 : index
    %7 = vector.load %arg7[%c1, %c1_5] : memref<18x18xf32, #tpu.memory_space<vmem>>, vector<16x16xf32>
    tpu.vector_store %arg7[%c1, %c1_5], %6 {strides = array<i32>} : memref<18x18xf32, #tpu.memory_space<vmem>>, vector<16x16xf32>,
    %cst_6 = arith.constant 0.000000e+00 : f32
    %8 = vector.broadcast %cst_6 : f32 to vector<16x16xf32>
    %c0_7 = arith.constant 0 : index
    %c0_8 = arith.constant 0 : index
    %9 = vector.load %arg7[%c0_7, %c0_8] : memref<18x18xf32, #tpu.memory_space<vmem>>, vector<16x18xf32>
    %10 = vector.extract_strided_slice %9 {offsets = [0, 0], sizes = [16, 16], strides = [1, 1]} : vector<16x18xf32> to vector<16x16xf32>
    %c0_i32_9 = arith.constant 0 : i32
    %11 = arith.addi %4, %c0_i32_9 : i32
    %c0_i32_10 = arith.constant 0 : i32
    %12 = arith.addi %11, %c0_i32_10 : i32
    %13 = arith.index_cast %12 : i32 to index
    %14 = memref.load %arg2[%13] : memref<36xf32, #tpu.memory_space<smem>>
    %15 = vector.broadcast %14 : f32 to vector<16x16xf32>
    %16 = arith.mulf %10, %15 : vector<16x16xf32>
    %17 = arith.addf %8, %16 : vector<16x16xf32>
    %18 = vector.extract_strided_slice %9 {offsets = [0, 1], sizes = [16, 16], strides = [1, 1]} : vector<16x18xf32> to vector<16x16xf32>
    %c0_i32_11 = arith.constant 0 : i32
    %19 = arith.addi %4, %c0_i32_11 : i32
    %c1_i32 = arith.constant 1 : i32
    %20 = arith.addi %19, %c1_i32 : i32
    %21 = arith.index_cast %20 : i32 to index
    %22 = memref.load %arg2[%21] : memref<36xf32, #tpu.memory_space<smem>>
    %23 = vector.broadcast %22 : f32 to vector<16x16xf32>
    %24 = arith.mulf %18, %23 : vector<16x16xf32>
    %25 = arith.addf %17, %24 : vector<16x16xf32>
    %26 = vector.extract_strided_slice %9 {offsets = [0, 2], sizes = [16, 16], strides = [1, 1]} : vector<16x18xf32> to vector<16x16xf32>
    %c0_i32_12 = arith.constant 0 : i32
    %27 = arith.addi %4, %c0_i32_12 : i32
    %c2_i32_13 = arith.constant 2 : i32
    %28 = arith.addi %27, %c2_i32_13 : i32
    %29 = arith.index_cast %28 : i32 to index
    %30 = memref.load %arg2[%29] : memref<36xf32, #tpu.memory_space<smem>>
    %31 = vector.broadcast %30 : f32 to vector<16x16xf32>
    %32 = arith.mulf %26, %31 : vector<16x16xf32>
    %33 = arith.addf %25, %32 : vector<16x16xf32>
    %c1_14 = arith.constant 1 : index
    %c0_15 = arith.constant 0 : index
    %34 = vector.load %arg7[%c1_14, %c0_15] : memref<18x18xf32, #tpu.memory_space<vmem>>, vector<16x18xf32>
    %35 = vector.extract_strided_slice %34 {offsets = [0, 0], sizes = [16, 16], strides = [1, 1]} : vector<16x18xf32> to vector<16x16xf32>
    %c3_i32 = arith.constant 3 : i32
    %36 = arith.addi %4, %c3_i32 : i32
    %c0_i32_16 = arith.constant 0 : i32
    %37 = arith.addi %36, %c0_i32_16 : i32
    %38 = arith.index_cast %37 : i32 to index
    %39 = memref.load %arg2[%38] : memref<36xf32, #tpu.memory_space<smem>>
    %40 = vector.broadcast %39 : f32 to vector<16x16xf32>
    %41 = arith.mulf %35, %40 : vector<16x16xf32>
    %42 = arith.addf %33, %41 : vector<16x16xf32>
    %43 = vector.extract_strided_slice %34 {offsets = [0, 1], sizes = [16, 16], strides = [1, 1]} : vector<16x18xf32> to vector<16x16xf32>
    %c3_i32_17 = arith.constant 3 : i32
    %44 = arith.addi %4, %c3_i32_17 : i32
    %c1_i32_18 = arith.constant 1 : i32
    %45 = arith.addi %44, %c1_i32_18 : i32
    %46 = arith.index_cast %45 : i32 to index
    %47 = memref.load %arg2[%46] : memref<36xf32, #tpu.memory_space<smem>>
    %48 = vector.broadcast %47 : f32 to vector<16x16xf32>
    %49 = arith.mulf %43, %48 : vector<16x16xf32>
    %50 = arith.addf %42, %49 : vector<16x16xf32>
    %51 = vector.extract_strided_slice %34 {offsets = [0, 2], sizes = [16, 16], strides = [1, 1]} : vector<16x18xf32> to vector<16x16xf32>
    %c3_i32_19 = arith.constant 3 : i32
    %52 = arith.addi %4, %c3_i32_19 : i32
    %c2_i32_20 = arith.constant 2 : i32
    %53 = arith.addi %52, %c2_i32_20 : i32
    %54 = arith.index_cast %53 : i32 to index
    %55 = memref.load %arg2[%54] : memref<36xf32, #tpu.memory_space<smem>>
    %56 = vector.broadcast %55 : f32 to vector<16x16xf32>
    %57 = arith.mulf %51, %56 : vector<16x16xf32>
    %58 = arith.addf %50, %57 : vector<16x16xf32>
    %c2 = arith.constant 2 : index
    %c0_21 = arith.constant 0 : index
    %59 = vector.load %arg7[%c2, %c0_21] : memref<18x18xf32, #tpu.memory_space<vmem>>, vector<16x18xf32>
    %60 = vector.extract_strided_slice %59 {offsets = [0, 0], sizes = [16, 16], strides = [1, 1]} : vector<16x18xf32> to vector<16x16xf32>
    %c6_i32 = arith.constant 6 : i32
    %61 = arith.addi %4, %c6_i32 : i32
    %c0_i32_22 = arith.constant 0 : i32
    %62 = arith.addi %61, %c0_i32_22 : i32
    %63 = arith.index_cast %62 : i32 to index
    %64 = memref.load %arg2[%63] : memref<36xf32, #tpu.memory_space<smem>>
    %65 = vector.broadcast %64 : f32 to vector<16x16xf32>
    %66 = arith.mulf %60, %65 : vector<16x16xf32>
    %67 = arith.addf %58, %66 : vector<16x16xf32>
    %68 = vector.extract_strided_slice %59 {offsets = [0, 1], sizes = [16, 16], strides = [1, 1]} : vector<16x18xf32> to vector<16x16xf32>
    %c6_i32_23 = arith.constant 6 : i32
    %69 = arith.addi %4, %c6_i32_23 : i32
    %c1_i32_24 = arith.constant 1 : i32
    %70 = arith.addi %69, %c1_i32_24 : i32
    %71 = arith.index_cast %70 : i32 to index
    %72 = memref.load %arg2[%71] : memref<36xf32, #tpu.memory_space<smem>>
    %73 = vector.broadcast %72 : f32 to vector<16x16xf32>
    %74 = arith.mulf %68, %73 : vector<16x16xf32>
    %75 = arith.addf %67, %74 : vector<16x16xf32>
    %76 = vector.extract_strided_slice %59 {offsets = [0, 2], sizes = [16, 16], strides = [1, 1]} : vector<16x18xf32> to vector<16x16xf32>
    %c6_i32_25 = arith.constant 6 : i32
    %77 = arith.addi %4, %c6_i32_25 : i32
    %c2_i32_26 = arith.constant 2 : i32
    %78 = arith.addi %77, %c2_i32_26 : i32
    %79 = arith.index_cast %78 : i32 to index
    %80 = memref.load %arg2[%79] : memref<36xf32, #tpu.memory_space<smem>>
    %81 = vector.broadcast %80 : f32 to vector<16x16xf32>
    %82 = arith.mulf %76, %81 : vector<16x16xf32>
    %83 = arith.addf %75, %82 : vector<16x16xf32>
    %84 = arith.index_cast %3 : i32 to index
    %85 = memref.load %arg3[%84] : memref<4xf32, #tpu.memory_space<smem>>
    %86 = vector.broadcast %85 : f32 to vector<16x16xf32>
    %87 = arith.mulf %83, %86 : vector<16x16xf32>
    %88 = arith.index_cast %3 : i32 to index
    %89 = memref.load %arg4[%88] : memref<4xf32, #tpu.memory_space<smem>>
    %90 = vector.broadcast %89 : f32 to vector<16x16xf32>
    %91 = arith.addf %87, %90 : vector<16x16xf32>
    %cst_27 = arith.constant 0.000000e+00 : f32
    %92 = vector.broadcast %cst_27 : f32 to vector<16x16xf32>
    %93 = arith.maximumf %91, %92 : vector<16x16xf32>
    %c0_28 = arith.constant 0 : index
    %c0_29 = arith.constant 0 : index
    %c0_30 = arith.constant 0 : index
    %c0_31 = arith.constant 0 : index
    %94 = vector.load %arg6[%c0_28, %c0_29, %c0_30, %c0_31] : memref<1x2x16x16xf32, #tpu.memory_space<vmem>>, vector<1x1x16x16xf32>
    %95 = vector.shape_cast %94 : vector<1x1x16x16xf32> to vector<16x16xf32>
    %96 = vector.shape_cast %93 : vector<16x16xf32> to vector<1x1x16x16xf32>
    tpu.vector_store %arg6[%c0_28, %c0_29, %c0_30, %c0_31], %96 {strides = array<i32>} : memref<1x2x16x16xf32, #tpu.memory_space<vmem>>, vector<1x1x16x16xf32>,
    %c2_i32_32 = arith.constant 2 : i32
    %97 = arith.muli %arg1, %c2_i32_32 : i32
    %c1_i32_33 = arith.constant 1 : i32
    %98 = arith.addi %97, %c1_i32_33 : i32
    %c9_i32_34 = arith.constant 9 : i32
    %99 = arith.muli %98, %c9_i32_34 : i32
    %c0_35 = arith.constant 0 : index
    %c1_36 = arith.constant 1 : index
    %c0_37 = arith.constant 0 : index
    %c0_38 = arith.constant 0 : index
    %100 = vector.load %arg5[%c0_35, %c1_36, %c0_37, %c0_38] : memref<1x2x16x16xf32, #tpu.memory_space<vmem>>, vector<1x1x16x16xf32>
    %101 = vector.shape_cast %100 : vector<1x1x16x16xf32> to vector<16x16xf32>
    %c1_39 = arith.constant 1 : index
    %c1_40 = arith.constant 1 : index
    %102 = vector.load %arg7[%c1_39, %c1_40] : memref<18x18xf32, #tpu.memory_space<vmem>>, vector<16x16xf32>
    tpu.vector_store %arg7[%c1_39, %c1_40], %101 {strides = array<i32>} : memref<18x18xf32, #tpu.memory_space<vmem>>, vector<16x16xf32>,
    %cst_41 = arith.constant 0.000000e+00 : f32
    %103 = vector.broadcast %cst_41 : f32 to vector<16x16xf32>
    %c0_42 = arith.constant 0 : index
    %c0_43 = arith.constant 0 : index
    %104 = vector.load %arg7[%c0_42, %c0_43] : memref<18x18xf32, #tpu.memory_space<vmem>>, vector<16x18xf32>
    %105 = vector.extract_strided_slice %104 {offsets = [0, 0], sizes = [16, 16], strides = [1, 1]} : vector<16x18xf32> to vector<16x16xf32>
    %c0_i32_44 = arith.constant 0 : i32
    %106 = arith.addi %99, %c0_i32_44 : i32
    %c0_i32_45 = arith.constant 0 : i32
    %107 = arith.addi %106, %c0_i32_45 : i32
    %108 = arith.index_cast %107 : i32 to index
    %109 = memref.load %arg2[%108] : memref<36xf32, #tpu.memory_space<smem>>
    %110 = vector.broadcast %109 : f32 to vector<16x16xf32>
    %111 = arith.mulf %105, %110 : vector<16x16xf32>
    %112 = arith.addf %103, %111 : vector<16x16xf32>
    %113 = vector.extract_strided_slice %104 {offsets = [0, 1], sizes = [16, 16], strides = [1, 1]} : vector<16x18xf32> to vector<16x16xf32>
    %c0_i32_46 = arith.constant 0 : i32
    %114 = arith.addi %99, %c0_i32_46 : i32
    %c1_i32_47 = arith.constant 1 : i32
    %115 = arith.addi %114, %c1_i32_47 : i32
    %116 = arith.index_cast %115 : i32 to index
    %117 = memref.load %arg2[%116] : memref<36xf32, #tpu.memory_space<smem>>
    %118 = vector.broadcast %117 : f32 to vector<16x16xf32>
    %119 = arith.mulf %113, %118 : vector<16x16xf32>
    %120 = arith.addf %112, %119 : vector<16x16xf32>
    %121 = vector.extract_strided_slice %104 {offsets = [0, 2], sizes = [16, 16], strides = [1, 1]} : vector<16x18xf32> to vector<16x16xf32>
    %c0_i32_48 = arith.constant 0 : i32
    %122 = arith.addi %99, %c0_i32_48 : i32
    %c2_i32_49 = arith.constant 2 : i32
    %123 = arith.addi %122, %c2_i32_49 : i32
    %124 = arith.index_cast %123 : i32 to index
    %125 = memref.load %arg2[%124] : memref<36xf32, #tpu.memory_space<smem>>
    %126 = vector.broadcast %125 : f32 to vector<16x16xf32>
    %127 = arith.mulf %121, %126 : vector<16x16xf32>
    %128 = arith.addf %120, %127 : vector<16x16xf32>
    %c1_50 = arith.constant 1 : index
    %c0_51 = arith.constant 0 : index
    %129 = vector.load %arg7[%c1_50, %c0_51] : memref<18x18xf32, #tpu.memory_space<vmem>>, vector<16x18xf32>
    %130 = vector.extract_strided_slice %129 {offsets = [0, 0], sizes = [16, 16], strides = [1, 1]} : vector<16x18xf32> to vector<16x16xf32>
    %c3_i32_52 = arith.constant 3 : i32
    %131 = arith.addi %99, %c3_i32_52 : i32
    %c0_i32_53 = arith.constant 0 : i32
    %132 = arith.addi %131, %c0_i32_53 : i32
    %133 = arith.index_cast %132 : i32 to index
    %134 = memref.load %arg2[%133] : memref<36xf32, #tpu.memory_space<smem>>
    %135 = vector.broadcast %134 : f32 to vector<16x16xf32>
    %136 = arith.mulf %130, %135 : vector<16x16xf32>
    %137 = arith.addf %128, %136 : vector<16x16xf32>
    %138 = vector.extract_strided_slice %129 {offsets = [0, 1], sizes = [16, 16], strides = [1, 1]} : vector<16x18xf32> to vector<16x16xf32>
    %c3_i32_54 = arith.constant 3 : i32
    %139 = arith.addi %99, %c3_i32_54 : i32
    %c1_i32_55 = arith.constant 1 : i32
    %140 = arith.addi %139, %c1_i32_55 : i32
    %141 = arith.index_cast %140 : i32 to index
    %142 = memref.load %arg2[%141] : memref<36xf32, #tpu.memory_space<smem>>
    %143 = vector.broadcast %142 : f32 to vector<16x16xf32>
    %144 = arith.mulf %138, %143 : vector<16x16xf32>
    %145 = arith.addf %137, %144 : vector<16x16xf32>
    %146 = vector.extract_strided_slice %129 {offsets = [0, 2], sizes = [16, 16], strides = [1, 1]} : vector<16x18xf32> to vector<16x16xf32>
    %c3_i32_56 = arith.constant 3 : i32
    %147 = arith.addi %99, %c3_i32_56 : i32
    %c2_i32_57 = arith.constant 2 : i32
    %148 = arith.addi %147, %c2_i32_57 : i32
    %149 = arith.index_cast %148 : i32 to index
    %150 = memref.load %arg2[%149] : memref<36xf32, #tpu.memory_space<smem>>
    %151 = vector.broadcast %150 : f32 to vector<16x16xf32>
    %152 = arith.mulf %146, %151 : vector<16x16xf32>
    %153 = arith.addf %145, %152 : vector<16x16xf32>
    %c2_58 = arith.constant 2 : index
    %c0_59 = arith.constant 0 : index
    %154 = vector.load %arg7[%c2_58, %c0_59] : memref<18x18xf32, #tpu.memory_space<vmem>>, vector<16x18xf32>
    %155 = vector.extract_strided_slice %154 {offsets = [0, 0], sizes = [16, 16], strides = [1, 1]} : vector<16x18xf32> to vector<16x16xf32>
    %c6_i32_60 = arith.constant 6 : i32
    %156 = arith.addi %99, %c6_i32_60 : i32
    %c0_i32_61 = arith.constant 0 : i32
    %157 = arith.addi %156, %c0_i32_61 : i32
    %158 = arith.index_cast %157 : i32 to index
    %159 = memref.load %arg2[%158] : memref<36xf32, #tpu.memory_space<smem>>
    %160 = vector.broadcast %159 : f32 to vector<16x16xf32>
    %161 = arith.mulf %155, %160 : vector<16x16xf32>
    %162 = arith.addf %153, %161 : vector<16x16xf32>
    %163 = vector.extract_strided_slice %154 {offsets = [0, 1], sizes = [16, 16], strides = [1, 1]} : vector<16x18xf32> to vector<16x16xf32>
    %c6_i32_62 = arith.constant 6 : i32
    %164 = arith.addi %99, %c6_i32_62 : i32
    %c1_i32_63 = arith.constant 1 : i32
    %165 = arith.addi %164, %c1_i32_63 : i32
    %166 = arith.index_cast %165 : i32 to index
    %167 = memref.load %arg2[%166] : memref<36xf32, #tpu.memory_space<smem>>
    %168 = vector.broadcast %167 : f32 to vector<16x16xf32>
    %169 = arith.mulf %163, %168 : vector<16x16xf32>
    %170 = arith.addf %162, %169 : vector<16x16xf32>
    %171 = vector.extract_strided_slice %154 {offsets = [0, 2], sizes = [16, 16], strides = [1, 1]} : vector<16x18xf32> to vector<16x16xf32>
    %c6_i32_64 = arith.constant 6 : i32
    %172 = arith.addi %99, %c6_i32_64 : i32
    %c2_i32_65 = arith.constant 2 : i32
    %173 = arith.addi %172, %c2_i32_65 : i32
    %174 = arith.index_cast %173 : i32 to index
    %175 = memref.load %arg2[%174] : memref<36xf32, #tpu.memory_space<smem>>
    %176 = vector.broadcast %175 : f32 to vector<16x16xf32>
    %177 = arith.mulf %171, %176 : vector<16x16xf32>
    %178 = arith.addf %170, %177 : vector<16x16xf32>
    %179 = arith.index_cast %98 : i32 to index
    %180 = memref.load %arg3[%179] : memref<4xf32, #tpu.memory_space<smem>>
    %181 = vector.broadcast %180 : f32 to vector<16x16xf32>
    %182 = arith.mulf %178, %181 : vector<16x16xf32>
    %183 = arith.index_cast %98 : i32 to index
    %184 = memref.load %arg4[%183] : memref<4xf32, #tpu.memory_space<smem>>
    %185 = vector.broadcast %184 : f32 to vector<16x16xf32>
    %186 = arith.addf %182, %185 : vector<16x16xf32>
    %cst_66 = arith.constant 0.000000e+00 : f32
    %187 = vector.broadcast %cst_66 : f32 to vector<16x16xf32>
    %188 = arith.maximumf %186, %187 : vector<16x16xf32>
    %c0_67 = arith.constant 0 : index
    %c1_68 = arith.constant 1 : index
    %c0_69 = arith.constant 0 : index
    %c0_70 = arith.constant 0 : index
    %189 = vector.load %arg6[%c0_67, %c1_68, %c0_69, %c0_70] : memref<1x2x16x16xf32, #tpu.memory_space<vmem>>, vector<1x1x16x16xf32>
    %190 = vector.shape_cast %189 : vector<1x1x16x16xf32> to vector<16x16xf32>
    %191 = vector.shape_cast %188 : vector<16x16xf32> to vector<1x1x16x16xf32>
    tpu.vector_store %arg6[%c0_67, %c1_68, %c0_69, %c0_70], %191 {strides = array<i32>} : memref<1x2x16x16xf32, #tpu.memory_space<vmem>>, vector<1x1x16x16xf32>,
    return
  }
  func.func @transform_0(%arg0: i32, %arg1: i32) -> i32 {
    %c0_i32 = arith.constant 0 : i32
    %c0_i32_0 = arith.constant 0 : i32
    return %c0_i32 : i32
  }
  func.func @transform_1(%arg0: i32, %arg1: i32) -> i32 {
    %c0_i32 = arith.constant 0 : i32
    %c0_i32_0 = arith.constant 0 : i32
    return %c0_i32 : i32
  }
  func.func @transform_2(%arg0: i32, %arg1: i32) -> i32 {
    %c0_i32 = arith.constant 0 : i32
    %c0_i32_0 = arith.constant 0 : i32
    return %c0_i32 : i32
  }
  func.func @transform_3(%arg0: i32, %arg1: i32) -> (i32, i32, i32, i32) {
    %c0_i32 = arith.constant 0 : i32
    %c0_i32_0 = arith.constant 0 : i32
    %c0_i32_1 = arith.constant 0 : i32
    return %arg0, %arg1, %c0_i32, %c0_i32_0 : i32, i32, i32, i32
  }
  func.func @transform_4(%arg0: i32, %arg1: i32) -> (i32, i32, i32, i32) {
    %c0_i32 = arith.constant 0 : i32
    %c0_i32_0 = arith.constant 0 : i32
    %c0_i32_1 = arith.constant 0 : i32
    return %arg0, %arg1, %c0_i32, %c0_i32_0 : i32, i32, i32, i32
  }
}

</mosaic_0001>

<llo_original>
// kernel: dwconv_module.1
$region0: #{dwconv_module.1}
  #allocation0 [shape = 'u32[]', space=smem, size = 0x4, offset = 0x4, fixed_abs, tag = 'smem constant byte address 0x4 - core index']
  #allocation1 [shape = 'u32[72,128]{1,0:T(1,128)}', space=vmem, size = 0x9000, scoped, tag = 'internal scratch']
  #allocation2 [shape = 'f32[18,18]{1,0:T(8,128)}', space=vmem, size = 0x3000, scoped, tag = 'scratch operand']
  %s0 = inlined_call_operand.vmem [shape: f32[36], index: 0, kind: input, shape index: {}]
  %s1 = inlined_call_operand.vmem [shape: f32[4], index: 1, kind: input, shape index: {}]
  %s2 = inlined_call_operand.vmem [shape: f32[4], index: 2, kind: input, shape index: {}]
  %s3 = inlined_call_operand.hbm [shape: f32[2,4,16,16], index: 3, kind: input, shape index: {}]
  %s4 = inlined_call_operand.hbm [shape: f32[2,4,16,16], index: 4, kind: output, shape index: {}]
  %s5 = sld [smem:[#allocation0]]
  $region65: #{dwconv_module.1} parent=0
    _
  %s7 = ssub.s32 1, %s5
  %s8 = scalar_select 0, %s7, %s5
  $region1: #{dwconv_module.1} parent=0
    #allocation3 [shape = 'u8[512]{0}', space=smem, size = 0x200, scoped, tag = 'input window, operand 0, single buffered']
    #allocation4 [shape = 's32[2]{0}', space=sflag, size = 0x8, scoped, tag = 'scoped memory for dwconv_module.1']
    #allocation5 [shape = 's32[2]{0}', space=sflag, size = 0x8, scoped, tag = 'scoped memory for dwconv_module.1']
    #allocation6 [shape = 's32[2]{0}', space=sflag, size = 0x8, scoped, tag = 'scoped memory for dwconv_module.1']
    #allocation7 [shape = 'u8[512]{0}', space=smem, size = 0x200, scoped, tag = 'input window, operand 1, single buffered']
    #allocation8 [shape = 's32[1]{0}', space=sflag, size = 0x4, scoped, tag = 'scoped memory for dwconv_module.1']
    #allocation9 [shape = 'u8[512]{0}', space=smem, size = 0x200, scoped, tag = 'input window, operand 2, single buffered']
    #allocation10 [shape = 'u8[32768]{0}', space=vmem, size = 0x8000, scoped, tag = 'input window, operand 3']
    #allocation11 [shape = 'u8[32768]{0}', space=vmem, size = 0x8000, scoped, tag = 'output window, operand 0']
    %9 = vsyncpa [#allocation6], 0
    %10 = vsyncpa [#allocation8], 0
    %11 = vsyncpa [#allocation4], 0
    %s12 = scalar_lea.sflag [#allocation4], 1
    %13 = vsyncpa %s12, 0
    %14 = vsyncpa [#allocation5], 0
    %s15 = scalar_lea.sflag [#allocation5], 1
    %16 = vsyncpa %s15, 0
    loop: start=0, step=1, limit=6
    $region2: #{dwconv_module.1} parent=1 // loop_pre_header
      _
    $region3: #{dwconv_module.1} parent=1 // loop_header
      %s18 = sphi 0, %s22
      %p19 = scmp.ge.s32.totalorder %s18, 6
      %s25 = sphi 0, %s37
      %s26 = sphi 0, %s33
      %s27 = sphi 0, %s25
      %s28 = sphi 0, %s26
      %s29 = sphi 0, %s27
      %s30 = sphi 0, %s28
      %s38 = sphi 0, %s38
      %s40 = sphi 0, %s38
      %s41 = sphi 0, %s40
      %s55 = sphi 0, %s41
      %s59 = sphi 0, %s59
      %s61 = sphi 0, %s59
      %s62 = sphi 0, %s61
      %s76 = sphi 0, %s62
      %s80 = sphi 0, %s80
      %s82 = sphi 0, %s80
      %s83 = sphi 0, %s82
      %s97 = sphi 0, %s83
      %s105 = sphi 0, %s107
      %s108 = sphi 0, %s105
      %s109 = sphi 0, %s108
      %s125 = sphi 0, %s109
      %s133 = sphi 0, %s135
      %s136 = sphi 0, %s133
      %s137 = sphi 0, %s136
      %s153 = sphi 0, %s137
    $region4: #{dwconv_module.1} parent=1 // loop_header_branch
      %21 = sbr.rel (%p19) target = $region8
    $region5: #{dwconv_module.1} parent=1 // loop_body
      %s23 = ssub.s32 %s18, 1
      %s24 = ssub.s32 %s18, 2
      %s31 = sadd.s32 1, %s26
      %p32 = scmp.ge.s32.totalorder %s31, 2
      %s33 = scalar_select %p32, 0, %s31
      %s34 = sadd.s32 1, %s25
      %s35 = scalar_select %p32, %s34, %s25
      %p36 = scmp.ge.s32.totalorder %s35, 2
      %s37 = scalar_select %p36, 0, %s35
      %s39 = sadd.s32 %s38, 1
      %p42 = scmp.eq.s32.totalorder %s18, 3
      %p43 = scmp.ne.s32.totalorder %s38, %s40
      %p44 = scmp.eq.s32.totalorder %s18, 0
      %p45 = por %p43, %p44
      %p46 = scmp.ne.s32.totalorder %s38, %s40
      %p47 = scmp.eq.s32.totalorder %s23, 3
      %p48 = por %p46, %p47
      %p49 = scmp.ne.s32.totalorder %s40, %s41
      %p50 = scmp.eq.s32.totalorder %s23, 0
      %p51 = por %p49, %p50
      %p52 = scmp.ne.s32.totalorder %s40, %s41
      %p53 = scmp.eq.s32.totalorder %s24, 3
      %p54 = por %p52, %p53
      %p56 = scmp.ne.s32.totalorder %s41, %s55
      %p57 = scmp.eq.s32.totalorder %s24, 0
      %p58 = por %p56, %p57
      %s60 = sadd.s32 %s59, 1
      %p63 = scmp.eq.s32.totalorder %s18, 3
      %p64 = scmp.ne.s32.totalorder %s59, %s61
      %p65 = scmp.eq.s32.totalorder %s18, 0
      %p66 = por %p64, %p65
      %p67 = scmp.ne.s32.totalorder %s59, %s61
      %p68 = scmp.eq.s32.totalorder %s23, 3
      %p69 = por %p67, %p68
      %p70 = scmp.ne.s32.totalorder %s61, %s62
      %p71 = scmp.eq.s32.totalorder %s23, 0
      %p72 = por %p70, %p71
      %p73 = scmp.ne.s32.totalorder %s61, %s62
      %p74 = scmp.eq.s32.totalorder %s24, 3
      %p75 = por %p73, %p74
      %p77 = scmp.ne.s32.totalorder %s62, %s76
      %p78 = scmp.eq.s32.totalorder %s24, 0
      %p79 = por %p77, %p78
      %s81 = sadd.s32 %s80, 1
      %p84 = scmp.eq.s32.totalorder %s18, 3
      %p85 = scmp.ne.s32.totalorder %s80, %s82
      %p86 = scmp.eq.s32.totalorder %s18, 0
      %p87 = por %p85, %p86
      %p88 = scmp.ne.s32.totalorder %s80, %s82
      %p89 = scmp.eq.s32.totalorder %s23, 3
      %p90 = por %p88, %p89
      %p91 = scmp.ne.s32.totalorder %s82, %s83
      %p92 = scmp.eq.s32.totalorder %s23, 0
      %p93 = por %p91, %p92
      %p94 = scmp.ne.s32.totalorder %s82, %s83
      %p95 = scmp.eq.s32.totalorder %s24, 3
      %p96 = por %p94, %p95
      %p98 = scmp.ne.s32.totalorder %s83, %s97
      %p99 = scmp.eq.s32.totalorder %s24, 0
      %p100 = por %p98, %p99
      %s101 = ssub.s32 %s25, %s37
      %s102 = ssub.s32 %s26, %s33
      %s103 = sor.u32 %s101, %s102
      %p104 = scmp.eq.s32.totalorder %s103, 0
      %s106 = sadd.s32 %s105, 1
      %s107 = scalar_select %p104, %s105, %s106
      %p110 = pneg %p104
      %p111 = scmp.eq.s32.totalorder %s18, 3
      %p112 = por %p110, %p111
      %p113 = scmp.ne.s32.totalorder %s105, %s108
      %p114 = scmp.eq.s32.totalorder %s18, 0
      %p115 = por %p113, %p114
      %p116 = scmp.ne.s32.totalorder %s105, %s108
      %p117 = scmp.eq.s32.totalorder %s23, 3
      %p118 = por %p116, %p117
      %p119 = scmp.ne.s32.totalorder %s108, %s109
      %p120 = scmp.eq.s32.totalorder %s23, 0
      %p121 = por %p119, %p120
      %p122 = scmp.ne.s32.totalorder %s108, %s109
      %p123 = scmp.eq.s32.totalorder %s24, 3
      %p124 = por %p122, %p123
      %p126 = scmp.ne.s32.totalorder %s109, %s125
      %p127 = scmp.eq.s32.totalorder %s24, 0
      %p128 = por %p126, %p127
      %s129 = ssub.s32 %s25, %s37
      %s130 = ssub.s32 %s26, %s33
      %s131 = sor.u32 %s129, %s130
      %p132 = scmp.eq.s32.totalorder %s131, 0
      %s134 = sadd.s32 %s133, 1
      %s135 = scalar_select %p132, %s133, %s134
      %p138 = pneg %p132
      %p139 = scmp.eq.s32.totalorder %s18, 3
      %p140 = por %p138, %p139
      %p141 = scmp.ne.s32.totalorder %s133, %s136
      %p142 = scmp.eq.s32.totalorder %s18, 0
      %p143 = por %p141, %p142
      %p144 = scmp.ne.s32.totalorder %s133, %s136
      %p145 = scmp.eq.s32.totalorder %s23, 3
      %p146 = por %p144, %p145
      %p147 = scmp.ne.s32.totalorder %s136, %s137
      %p148 = scmp.eq.s32.totalorder %s23, 0
      %p149 = por %p147, %p148
      %p150 = scmp.ne.s32.totalorder %s136, %s137
      %p151 = scmp.eq.s32.totalorder %s24, 3
      %p152 = por %p150, %p151
      %p154 = scmp.ne.s32.totalorder %s137, %s153
      %p155 = scmp.eq.s32.totalorder %s24, 0
      %p156 = por %p154, %p155
      %p157 = scmp.le.s32.totalorder 1, %s18
      %p158 = scmp.lt.s32.totalorder %s18, 5
      %p159 = pnand %p157, %p158
      %p160 = pneg %p159
      // Predicated region
      $region9: #{dwconv_module.1} parent=5 // pred_check
        _
      $region10: #{dwconv_module.1} parent=5 // pred_check_branch
        %162 = sbr.rel (%p159) target = $region12
      $region11: #{dwconv_module.1} parent=5 // pred_region
        %s163 = ssub.s32 %s18, 1
        // Predicated region
        $region13: #{dwconv_module.1} parent=11 // pred_check
          %p164 = pneg %p51
        $region14: #{dwconv_module.1} parent=11 // pred_check_branch
          %166 = sbr.rel (%p164) target = $region16
        $region15: #{dwconv_module.1} parent=11 // pred_region
          %168 = vsyncadd [#allocation6], 0
          %s170 = sshll.u32 %s0, 4
          %s171 = int_to_ptr.vmem [resolvable:$true] %s170
          %173 = dma.vmem_to_smem %s171, 16, [#allocation3], [#allocation6]
        $region16: #{dwconv_module.1} parent=11 // pred_fallthru
          _
        // Predicated region
        $region17: #{dwconv_module.1} parent=11 // pred_check
          %p174 = pneg %p72
        $region18: #{dwconv_module.1} parent=11 // pred_check_branch
          %176 = sbr.rel (%p174) target = $region20
        $region19: #{dwconv_module.1} parent=11 // pred_region
          %178 = vsyncadd [#allocation8], 0
          %s180 = sshll.u32 %s1, 4
          %s181 = int_to_ptr.vmem [resolvable:$true] %s180
          %183 = dma.vmem_to_smem %s181, 16, [#allocation7], [#allocation8]
        $region20: #{dwconv_module.1} parent=11 // pred_fallthru
          _
        // Predicated region
        $region21: #{dwconv_module.1} parent=11 // pred_check
          %p184 = pneg %p93
        $region22: #{dwconv_module.1} parent=11 // pred_check_branch
          %186 = sbr.rel (%p184) target = $region24
        $region23: #{dwconv_module.1} parent=11 // pred_region
          %188 = vsyncadd [#allocation8], 0
          %s190 = sshll.u32 %s2, 4
          %s191 = int_to_ptr.vmem [resolvable:$true] %s190
          %193 = dma.vmem_to_smem %s191, 16, [#allocation9], [#allocation8]
        $region24: #{dwconv_module.1} parent=11 // pred_fallthru
          _
      $region12: #{dwconv_module.1} parent=5 // pred_fallthru
        _
      %p194 = scmp.lt.s32.totalorder %s18, 4
      // Predicated region
      $region25: #{dwconv_module.1} parent=5 // pred_check
        %p195 = pneg %p194
      $region26: #{dwconv_module.1} parent=5 // pred_check_branch
        %197 = sbr.rel (%p195) target = $region28
      $region27: #{dwconv_module.1} parent=5 // pred_region
        // Predicated region
        $region29: #{dwconv_module.1} parent=27 // pred_check
          %p198 = pneg %p115
        $region30: #{dwconv_module.1} parent=27 // pred_check_branch
          %200 = sbr.rel (%p198) target = $region32
        $region31: #{dwconv_module.1} parent=27 // pred_region
          %s201 = sand.u32 %s105, 1
          %s202 = scalar_lea.sflag [#allocation4], %s201
          %s203 = sand.u32 %s105, 1
          %s204 = smul.addr %s203, 32
          %s205 = scalar_lea.vmem [#allocation10], %s204
          %s206 = smul.u32 2, %s26
          %208 = vsyncadd %s202, 0
          %s209 = smul.addr %s206, 2
          %s210 = smul.addr %s25, 8
          %s211 = sadd.s32 %s209, %s210
          %s212 = smul.addr %s211, 8
          %s213 = scalar_lea.hbm %s3, %s212
          %s214 = sshll.u32 %s213, 4
          %s215 = int_to_ptr.hbm [resolvable:$true] %s214
          %s216 = sshll.u32 %s205, 4
          %s217 = int_to_ptr.vmem [resolvable:$true] %s216
          %222 = dma.hbm_to_vmem [thread:$0]  %s215, 512, %s217, %s202, 128, 128, 8
        $region32: #{dwconv_module.1} parent=27 // pred_fallthru
          _
      $region28: #{dwconv_module.1} parent=5 // pred_fallthru
        _
      %p223 = scmp.le.s32.totalorder 1, %s18
      %p224 = scmp.lt.s32.totalorder %s18, 5
      %p225 = pnand %p223, %p224
      %p226 = pneg %p225
      // Predicated region
      $region33: #{dwconv_module.1} parent=5 // pred_check
        _
      $region34: #{dwconv_module.1} parent=5 // pred_check_branch
        %228 = sbr.rel (%p225) target = $region36
      $region35: #{dwconv_module.1} parent=5 // pred_region
        %s229 = ssub.s32 %s18, 1
        // Predicated region
        $region37: #{dwconv_module.1} parent=35 // pred_check
          %p230 = pneg %p51
        $region38: #{dwconv_module.1} parent=35 // pred_check_branch
          %232 = sbr.rel (%p230) target = $region40
        $region39: #{dwconv_module.1} parent=35 // pred_region
          %234 = dma.done [#allocation6], 16
        $region40: #{dwconv_module.1} parent=35 // pred_fallthru
          _
        // Predicated region
        $region41: #{dwconv_module.1} parent=35 // pred_check
          %p235 = pneg %p72
        $region42: #{dwconv_module.1} parent=35 // pred_check_branch
          %237 = sbr.rel (%p235) target = $region44
        $region43: #{dwconv_module.1} parent=35 // pred_region
          %239 = dma.done [#allocation8], 16
        $region44: #{dwconv_module.1} parent=35 // pred_fallthru
          _
        // Predicated region
        $region45: #{dwconv_module.1} parent=35 // pred_check
          %p240 = pneg %p93
        $region46: #{dwconv_module.1} parent=35 // pred_check_branch
          %242 = sbr.rel (%p240) target = $region48
        $region47: #{dwconv_module.1} parent=35 // pred_region
          %244 = dma.done [#allocation8], 16
        $region48: #{dwconv_module.1} parent=35 // pred_fallthru
          _
        %s245 = sand.u32 %s108, 1
        %s246 = scalar_lea.sflag [#allocation4], %s245
        %s247 = sand.u32 %s108, 1
        %s248 = smul.addr %s247, 32
        %s249 = scalar_lea.vmem [#allocation10], %s248
        // Predicated region
        $region49: #{dwconv_module.1} parent=35 // pred_check
          %p250 = pneg %p121
        $region50: #{dwconv_module.1} parent=35 // pred_check_branch
          %252 = sbr.rel (%p250) target = $region52
        $region51: #{dwconv_module.1} parent=35 // pred_region
          %254 = dma.done %s246, 512
        $region52: #{dwconv_module.1} parent=35 // pred_fallthru
          _
        %255 = sfence
        %p256 = pneg %p51
        %p257 = pneg %p48
        %p258 = pneg %p72
        %p259 = pneg %p69
        %p260 = pneg %p93
        %p261 = pneg %p90
        %s262 = sand.u32 %s108, 1
        %s263 = scalar_lea.sflag [#allocation4], %s262
        %s264 = sand.u32 %s108, 1
        %s265 = smul.addr %s264, 32
        %s266 = scalar_lea.vmem [#allocation10], %s265
        %p267 = pneg %p121
        %p268 = pneg %p118
        %p269 = pneg %p149
        %p270 = pneg %p146
        %s271 = sand.u32 %s136, 1
        %s272 = scalar_lea.sflag [#allocation5], %s271
        %s273 = sand.u32 %s136, 1
        %s274 = smul.addr %s273, 32
        %s275 = scalar_lea.vmem [#allocation11], %s274
        %s276 = smul.u32 2, %s28
        %s277 = smul.u32 2, %s28
        %vm278 = vcmask 146432
        %279 = vst.msk [vmem:[#allocation2] sm:$0xff] %vm278, 0.0
        %280 = vst.msk [vmem:[#allocation2 + $0x8] sm:$0xff] %vm278, 0.0
        %vm281 = vcmask 140288
        %282 = vst.msk [vmem:[#allocation2 + $0x10] sm:$0x3] %vm281, 0.0
        %s283 = smul.u32 %s28, 2
        %s284 = smul.u32 %s28, 18
        %v285 = vld [vmem:[%s249] sm:$0xff]
        %v286 = vld [vmem:[%s249 + $0x8] sm:$0xff]
        %289 = vrot.lane.b32.xlu0 %v285, 1
        %v290 = vpop.permute.xlu0 %289
        %291 = vrot.lane.b32.xlu0 %v286, 1
        %v292 = vpop.permute.xlu0 %291
        %vm295 = vcmask 138248
        %296 = vst.msk [vmem:[#allocation2 + $0x1] sm:$0xff] %vm295, %v290
        %297 = vst.msk [vmem:[#allocation2 + $0x9] sm:$0xff] %vm295, %v292
        %v298 = vld [vmem:[#allocation2] sm:$0xff]
        %v299 = vld [vmem:[#allocation2 + $0x8] sm:$0xff]
        %s300 = sld [smem:[#allocation3 + %s284]]
        %v301 = vstv %s300
        %v302 = vmul.f32 %v298, %v301
        %v303 = vmul.f32 %v299, %v301
        %v304 = vadd.f32 %v302, 0.0
        %v305 = vadd.f32 %v303, 0.0
        %s306 = sadd.s32 %s284, 1
        %s307 = sld [smem:[#allocation3 + %s306]]
        %v308 = vstv %s307
        %v309 = vmul.f32 %v298, %v308
        %v310 = vmul.f32 %v299, %v308
        %313 = vrot.lane.b32.xlu0 %v309, 127
        %v314 = vpop.permute.xlu0 %313
        %315 = vrot.lane.b32.xlu0 %v310, 127
        %v316 = vpop.permute.xlu0 %315
        %v319 = vadd.f32 %v304, %v314
        %v320 = vadd.f32 %v305, %v316
        %s321 = sadd.s32 %s284, 2
        %s322 = sld [smem:[#allocation3 + %s321]]
        %v323 = vstv %s322
        %v324 = vmul.f32 %v298, %v323
        %v325 = vmul.f32 %v299, %v323
        %328 = vrot.lane.b32.xlu0 %v324, 126
        %v329 = vpop.permute.xlu0 %328
        %330 = vrot.lane.b32.xlu0 %v325, 126
        %v331 = vpop.permute.xlu0 %330
        %v334 = vadd.f32 %v319, %v329
        %v335 = vadd.f32 %v320, %v331
        %v336 = vld [vmem:[#allocation2 + $0x1] sm:$0xff]
        %v337 = vld [vmem:[#allocation2 + $0x9] sm:$0xff]
        %s338 = sadd.s32 %s284, 3
        %s339 = sld [smem:[#allocation3 + %s338]]
        %v340 = vstv %s339
        %v341 = vmul.f32 %v336, %v340
        %v342 = vmul.f32 %v337, %v340
        %v343 = vadd.f32 %v334, %v341
        %v344 = vadd.f32 %v335, %v342
        %s345 = sadd.s32 %s284, 4
        %s346 = sld [smem:[#allocation3 + %s345]]
        %v347 = vstv %s346
        %v348 = vmul.f32 %v336, %v347
        %v349 = vmul.f32 %v337, %v347
        %352 = vrot.lane.b32.xlu0 %v348, 127
        %v353 = vpop.permute.xlu0 %352
        %354 = vrot.lane.b32.xlu0 %v349, 127
        %v355 = vpop.permute.xlu0 %354
        %v358 = vadd.f32 %v343, %v353
        %v359 = vadd.f32 %v344, %v355
        %s360 = sadd.s32 %s284, 5
        %s361 = sld [smem:[#allocation3 + %s360]]
        %v362 = vstv %s361
        %v363 = vmul.f32 %v336, %v362
        %v364 = vmul.f32 %v337, %v362
        %367 = vrot.lane.b32.xlu0 %v363, 126
        %v368 = vpop.permute.xlu0 %367
        %369 = vrot.lane.b32.xlu0 %v364, 126
        %v370 = vpop.permute.xlu0 %369
        %v373 = vadd.f32 %v358, %v368
        %v374 = vadd.f32 %v359, %v370
        %v375 = vld [vmem:[#allocation2 + $0x2] sm:$0xff]
        %v376 = vld [vmem:[#allocation2 + $0xa] sm:$0xff]
        %s377 = sadd.s32 %s284, 6
        %s378 = sld [smem:[#allocation3 + %s377]]
        %v379 = vstv %s378
        %v380 = vmul.f32 %v375, %v379
        %v381 = vmul.f32 %v376, %v379
        %v382 = vadd.f32 %v373, %v380
        %v383 = vadd.f32 %v374, %v381
        %s384 = sadd.s32 %s284, 7
        %s385 = sld [smem:[#allocation3 + %s384]]
        %v386 = vstv %s385
        %v387 = vmul.f32 %v375, %v386
        %v388 = vmul.f32 %v376, %v386
        %391 = vrot.lane.b32.xlu0 %v387, 127
        %v392 = vpop.permute.xlu0 %391
        %393 = vrot.lane.b32.xlu0 %v388, 127
        %v394 = vpop.permute.xlu0 %393
        %v397 = vadd.f32 %v382, %v392
        %v398 = vadd.f32 %v383, %v394
        %s399 = sadd.s32 %s284, 8
        %s400 = sld [smem:[#allocation3 + %s399]]
        %v401 = vstv %s400
        %v402 = vmul.f32 %v375, %v401
        %v403 = vmul.f32 %v376, %v401
        %406 = vrot.lane.b32.xlu0 %v402, 126
        %v407 = vpop.permute.xlu0 %406
        %408 = vrot.lane.b32.xlu0 %v403, 126
        %v409 = vpop.permute.xlu0 %408
        %v412 = vadd.f32 %v397, %v407
        %v413 = vadd.f32 %v398, %v409
        %s414 = sld [smem:[#allocation7 + %s283]]
        %v415 = vstv %s414
        %v416 = vmul.f32 %v412, %v415
        %v417 = vmul.f32 %v413, %v415
        %s418 = sld [smem:[#allocation9 + %s283]]
        %v419 = vstv %s418
        %v420 = vadd.f32 %v416, %v419
        %v421 = vadd.f32 %v417, %v419
        %v422 = vmax.f32 %v420, 0.0
        %v423 = vmax.f32 %v421, 0.0
        %vm424 = vcmask 130048
        %425 = vst.msk [vmem:[%s275] sm:$0xff] %vm424, %v422
        %426 = vst.msk [vmem:[%s275 + $0x8] sm:$0xff] %vm424, %v423
        %s427 = sadd.s32 %s283, 1
        %s428 = smul.u32 %s427, 9
        %s429 = scalar_lea.vmem %s249, 16 [#allocation10]
        %v430 = vld [vmem:[%s429] sm:$0xff]
        %v431 = vld [vmem:[%s429 + $0x8] sm:$0xff]
        %434 = vrot.lane.b32.xlu0 %v430, 1
        %v435 = vpop.permute.xlu0 %434
        %436 = vrot.lane.b32.xlu0 %v431, 1
        %v437 = vpop.permute.xlu0 %436
        %440 = vst.msk [vmem:[#allocation2 + $0x1] sm:$0xff] %vm295, %v435
        %441 = vst.msk [vmem:[#allocation2 + $0x9] sm:$0xff] %vm295, %v437
        %v442 = vld [vmem:[#allocation2] sm:$0xff]
        %v443 = vld [vmem:[#allocation2 + $0x8] sm:$0xff]
        %s444 = sld [smem:[#allocation3 + %s428]]
        %v445 = vstv %s444
        %v446 = vmul.f32 %v442, %v445
        %v447 = vmul.f32 %v443, %v445
        %v448 = vadd.f32 %v446, 0.0
        %v449 = vadd.f32 %v447, 0.0
        %s450 = sadd.s32 %s428, 1
        %s451 = sld [smem:[#allocation3 + %s450]]
        %v452 = vstv %s451
        %v453 = vmul.f32 %v442, %v452
        %v454 = vmul.f32 %v443, %v452
        %457 = vrot.lane.b32.xlu0 %v453, 127
        %v458 = vpop.permute.xlu0 %457
        %459 = vrot.lane.b32.xlu0 %v454, 127
        %v460 = vpop.permute.xlu0 %459
        %v463 = vadd.f32 %v448, %v458
        %v464 = vadd.f32 %v449, %v460
        %s465 = sadd.s32 %s428, 2
        %s466 = sld [smem:[#allocation3 + %s465]]
        %v467 = vstv %s466
        %v468 = vmul.f32 %v442, %v467
        %v469 = vmul.f32 %v443, %v467
        %472 = vrot.lane.b32.xlu0 %v468, 126
        %v473 = vpop.permute.xlu0 %472
        %474 = vrot.lane.b32.xlu0 %v469, 126
        %v475 = vpop.permute.xlu0 %474
        %v478 = vadd.f32 %v463, %v473
        %v479 = vadd.f32 %v464, %v475
        %v480 = vld [vmem:[#allocation2 + $0x1] sm:$0xff]
        %v481 = vld [vmem:[#allocation2 + $0x9] sm:$0xff]
        %s482 = sadd.s32 %s428, 3
        %s483 = sld [smem:[#allocation3 + %s482]]
        %v484 = vstv %s483
        %v485 = vmul.f32 %v480, %v484
        %v486 = vmul.f32 %v481, %v484
        %v487 = vadd.f32 %v478, %v485
        %v488 = vadd.f32 %v479, %v486
        %s489 = sadd.s32 %s428, 4
        %s490 = sld [smem:[#allocation3 + %s489]]
        %v491 = vstv %s490
        %v492 = vmul.f32 %v480, %v491
        %v493 = vmul.f32 %v481, %v491
        %496 = vrot.lane.b32.xlu0 %v492, 127
        %v497 = vpop.permute.xlu0 %496
        %498 = vrot.lane.b32.xlu0 %v493, 127
        %v499 = vpop.permute.xlu0 %498
        %v502 = vadd.f32 %v487, %v497
        %v503 = vadd.f32 %v488, %v499
        %s504 = sadd.s32 %s428, 5
        %s505 = sld [smem:[#allocation3 + %s504]]
        %v506 = vstv %s505
        %v507 = vmul.f32 %v480, %v506
        %v508 = vmul.f32 %v481, %v506
        %511 = vrot.lane.b32.xlu0 %v507, 126
        %v512 = vpop.permute.xlu0 %511
        %513 = vrot.lane.b32.xlu0 %v508, 126
        %v514 = vpop.permute.xlu0 %513
        %v517 = vadd.f32 %v502, %v512
        %v518 = vadd.f32 %v503, %v514
        %v519 = vld [vmem:[#allocation2 + $0x2] sm:$0xff]
        %v520 = vld [vmem:[#allocation2 + $0xa] sm:$0xff]
        %s521 = sadd.s32 %s428, 6
        %s522 = sld [smem:[#allocation3 + %s521]]
        %v523 = vstv %s522
        %v524 = vmul.f32 %v519, %v523
        %v525 = vmul.f32 %v520, %v523
        %v526 = vadd.f32 %v517, %v524
        %v527 = vadd.f32 %v518, %v525
        %s528 = sadd.s32 %s428, 7
        %s529 = sld [smem:[#allocation3 + %s528]]
        %v530 = vstv %s529
        %v531 = vmul.f32 %v519, %v530
        %v532 = vmul.f32 %v520, %v530
        %535 = vrot.lane.b32.xlu0 %v531, 127
        %v536 = vpop.permute.xlu0 %535
        %537 = vrot.lane.b32.xlu0 %v532, 127
        %v538 = vpop.permute.xlu0 %537
        %v541 = vadd.f32 %v526, %v536
        %v542 = vadd.f32 %v527, %v538
        %s543 = sadd.s32 %s428, 8
        %s544 = sld [smem:[#allocation3 + %s543]]
        %v545 = vstv %s544
        %v546 = vmul.f32 %v519, %v545
        %v547 = vmul.f32 %v520, %v545
        %550 = vrot.lane.b32.xlu0 %v546, 126
        %v551 = vpop.permute.xlu0 %550
        %552 = vrot.lane.b32.xlu0 %v547, 126
        %v553 = vpop.permute.xlu0 %552
        %v556 = vadd.f32 %v541, %v551
        %v557 = vadd.f32 %v542, %v553
        %s558 = sld [smem:[#allocation7 + %s427]]
        %v559 = vstv %s558
        %v560 = vmul.f32 %v556, %v559
        %v561 = vmul.f32 %v557, %v559
        %s562 = sld [smem:[#allocation9 + %s427]]
        %v563 = vstv %s562
        %v564 = vadd.f32 %v560, %v563
        %v565 = vadd.f32 %v561, %v563
        %v566 = vmax.f32 %v564, 0.0
        %v567 = vmax.f32 %v565, 0.0
        %s568 = scalar_lea.vmem %s275, 16 [#allocation11]
        %569 = vst.msk [vmem:[%s568] sm:$0xff] %vm424, %v566
        %570 = vst.msk [vmem:[%s568 + $0x8] sm:$0xff] %vm424, %v567
        %s571 = sand.u32 %s136, 1
        %s572 = scalar_lea.sflag [#allocation5], %s571
        %s573 = sand.u32 %s136, 1
        %s574 = smul.addr %s573, 32
        %s575 = scalar_lea.vmem [#allocation11], %s574
        // Predicated region
        $region53: #{dwconv_module.1} parent=35 // pred_check
          %p576 = pneg %p146
        $region54: #{dwconv_module.1} parent=35 // pred_check_branch
          %578 = sbr.rel (%p576) target = $region56
        $region55: #{dwconv_module.1} parent=35 // pred_region
          %s579 = smul.u32 2, %s28
          %581 = vsyncadd %s572, 0
          %s582 = smul.addr %s579, 2
          %s583 = smul.addr %s27, 8
          %s584 = sadd.s32 %s582, %s583
          %s585 = smul.addr %s584, 8
          %s586 = scalar_lea.hbm %s4, %s585
          %s587 = sshll.u32 %s575, 4
          %s588 = int_to_ptr.vmem [resolvable:$true] %s587
          %s589 = sshll.u32 %s586, 4
          %s590 = int_to_ptr.hbm [resolvable:$true] %s589
          %595 = dma.vmem_to_hbm [thread:$0]  %s588, 512, %s590, %s572, 128, 128, 8
        $region56: #{dwconv_module.1} parent=35 // pred_fallthru
          _
      $region36: #{dwconv_module.1} parent=5 // pred_fallthru
        _
      %p596 = scmp.le.s32.totalorder 2, %s18
      // Predicated region
      $region57: #{dwconv_module.1} parent=5 // pred_check
        %p597 = pneg %p596
      $region58: #{dwconv_module.1} parent=5 // pred_check_branch
        %599 = sbr.rel (%p597) target = $region60
      $region59: #{dwconv_module.1} parent=5 // pred_region
        %s600 = ssub.s32 %s18, 2
        // Predicated region
        $region61: #{dwconv_module.1} parent=59 // pred_check
          %p601 = pneg %p152
        $region62: #{dwconv_module.1} parent=59 // pred_check_branch
          %603 = sbr.rel (%p601) target = $region64
        $region63: #{dwconv_module.1} parent=59 // pred_region
          %s604 = sand.u32 %s137, 1
          %s605 = scalar_lea.sflag [#allocation5], %s604
          %s606 = sand.u32 %s137, 1
          %s607 = smul.addr %s606, 32
          %s608 = scalar_lea.vmem [#allocation11], %s607
          %610 = dma.done %s605, 512
        $region64: #{dwconv_module.1} parent=59 // pred_fallthru
          _
      $region60: #{dwconv_module.1} parent=5 // pred_fallthru
        _
    $region6: #{dwconv_module.1} parent=1 // loop_footer
      %s22 = sadd.s32 1, %s18
    $region7: #{dwconv_module.1} parent=1 // loop_footer_branch
      %17 = sbr.rel target = $region3
    $region8: #{dwconv_module.1} parent=1 // loop_exit
      _
    %611 = vsyncpa [#allocation4], 1
    %s612 = scalar_lea.sflag [#allocation4], 1
    %613 = vsyncpa %s612, 1
    %614 = vsyncpa [#allocation5], 1
    %s615 = scalar_lea.sflag [#allocation5], 1
    %616 = vsyncpa %s615, 1
    %617 = vsyncpa [#allocation6], 1
    %s618 = scalar_lea.sflag [#allocation6], 1
    %619 = vsyncpa %s618, 1
    %620 = vsyncpa [#allocation8], 1

</llo_original>
